<compile_context>
chip_gen: v5e
topology: v5e:2x2
jax: 0.10.0
libtpu: 0.0.40
codegen_flags: <defaults>
</compile_context>

<pallas_src>
import jax
import jax.numpy as jnp
from jax import lax
from jax.experimental import pallas as pl
from jax.experimental.pallas import tpu as pltpu


# ---------------------------------------------------------------------------
# Per-sample (M = 1) path: VPU multiply + XLU lane reduction, no MXU, no grid.
# ---------------------------------------------------------------------------
def _routing_vpu_kernel(x_ref, w_ref, b_ref, o_ref):
    # x_ref: (1, C)  flattened sample (broadcast over the E sublanes)
    # w_ref: (E, C)  nn.Linear weight, native layout (no transpose)
    # b_ref: (E, 1)  bias as a column
    # o_ref: (E, 1)  sigmoid(W @ x + b) as a column
    # TODO(synk): training-mode nn.Dropout (random mask + 1/(1-p) scaling) is
    # not implemented; dropout is identity at inference.
    prod = x_ref[...] * w_ref[...]                # VPU: (1,C)*(E,C) -> (E,C)
    y = jnp.sum(prod, axis=-1, keepdims=True)     # XLU lane reduce -> (E,1)
    o_ref[...] = jax.nn.sigmoid(y + b_ref[...]).astype(o_ref.dtype)


def routing_forward(x, weight, bias):
    """Faithful Pallas implementation of _routing.forward for one sample.

    Args:
      x:      any-shape array whose full flatten has length C (e.g. NCHW
              (1, C, 1, 1) from the adaptive-avg-pool in CondConv).
      weight: (num_experts, in_channels) — nn.Linear weight, used as-is.
      bias:   (num_experts,)
    Returns:
      (num_experts,) float32 routing weights in (0, 1).
    """
    e, c = weight.shape
    x_flat = x.reshape(-1)
    if x_flat.shape[0] != c:
        raise ValueError(
            f"torch.flatten(x) has length {x_flat.shape[0]} but nn.Linear "
            f"expects {c}; use routing_forward_batched for a batch of samples.")
    x_row = x_flat.reshape(1, c).astype(jnp.float32)
    w = weight.astype(jnp.float32)
    b_col = bias.reshape(e, 1).astype(jnp.float32)

    vmem = pltpu.MemorySpace.VMEM
    out = pl.pallas_call(
        _routing_vpu_kernel,
        out_shape=jax.ShapeDtypeStruct((e, 1), jnp.float32),
        in_specs=[pl.BlockSpec(memory_space=vmem)] * 3,
        out_specs=pl.BlockSpec(memory_space=vmem),
    )(x_row, w, b_col)
    return out.reshape(e)


# ---------------------------------------------------------------------------
# Batched path: (N, C) -> (N, E) in one pallas_call, gridded over row tiles.
# ---------------------------------------------------------------------------
def _routing_mxu_kernel(x_ref, w_ref, b_ref, o_ref):
    # x_ref: (TM, C) tile of flattened samples
    # w_ref: (E, C)  nn.Linear weight, native layout
    # b_ref: (1, E)
    # o_ref: (TM, E)
    # Contract over C directly against the (E, C) weight: no transposed copy.
    y = lax.dot_general(
        x_ref[...], w_ref[...],
        dimension_numbers=(((1,), (1,)), ((), ())),
        preferred_element_type=jnp.float32)
    # NOTE: with E=8 the store uses 8 of 128 lanes (masked vst); pad the expert
    # axis or fuse the consumer if the epilogue ever becomes store-bound.
    o_ref[...] = jax.nn.sigmoid(y + b_ref[...]).astype(o_ref.dtype)


def routing_forward_batched(x, weight, bias, *, tile_rows=128,
                            matmul_dtype=jnp.float32):
    """Batched routing head: per-sample _routing applied to N samples at once.

    Args:
      x: (N, C) or (N, C, 1, 1) — each sample flattened independently.
      weight: (E, C), bias: (E,).
      tile_rows: rows of N per grid step (128 default; 256 works well on
        v6e/v7x for large N).
      matmul_dtype: dtype fed to the MXU. jnp.bfloat16 is recommended on
        v6e/v7x (full-rate MXU, half the DMA bytes); accumulation stays f32.
        Keep f32 on v5e.
    Returns:
      (N, E) float32 sigmoid routing weights.
    """
    e, c = weight.shape
    n = x.shape[0]
    x2 = x.reshape(n, -1)
    if x2.shape[1] != c:
        raise ValueError(f"per-sample feature size {x2.shape[1]} != {c}")
    x2 = x2.astype(matmul_dtype)
    w = weight.astype(matmul_dtype)
    b_row = bias.reshape(1, e).astype(jnp.float32)

    tm = min(int(tile_rows), n)
    n_pad = pl.cdiv(n, tm) * tm
    if n_pad != n:
        x2 = jnp.pad(x2, ((0, n_pad - n), (0, 0)))

    out = pl.pallas_call(
        _routing_mxu_kernel,
        out_shape=jax.ShapeDtypeStruct((n_pad, e), jnp.float32),
        grid=(n_pad // tm,),
        in_specs=[
            pl.BlockSpec((tm, c), lambda i: (i, 0)),   # row tile of samples
            pl.BlockSpec((e, c), lambda i: (0, 0)),    # weight, reused per tile
            pl.BlockSpec((1, e), lambda i: (0, 0)),    # bias
        ],
        out_specs=pl.BlockSpec((tm, e), lambda i: (i, 0)),
        compiler_params=pltpu.CompilerParams(
            dimension_semantics=("parallel",)),        # megacore over row tiles
    )(x2, w, b_row)
    return out[:n] if n_pad != n else out


def init_routing_params(key, in_channels, num_experts):
    """Deterministic nn.Linear-style init: U(-1/sqrt(C), 1/sqrt(C))."""
    k_w, k_b = jax.random.split(key)
    bound = 1.0 / jnp.sqrt(jnp.float32(in_channels))
    weight = jax.random.uniform(
        k_w, (num_experts, in_channels), jnp.float32, -bound, bound)
    bias = jax.random.uniform(
        k_b, (num_experts,), jnp.float32, -bound, bound)
    return weight, bias


if __name__ == "__main__":
    in_channels = 32
    num_experts = 8
    dropout_rate = 0.2  # identity at inference; see TODO in the kernel.

    key = jax.random.PRNGKey(0)
    k_x, k_xb, k_p = jax.random.split(key, 3)
    weight, bias = init_routing_params(k_p, in_channels, num_experts)

    # Exact (matmul-free) f32 reference: immune to MXU precision defaults.
    def ref_routing(x2):                       # (N, C) -> (N, E)
        logits = jnp.sum(x2[:, None, :] * weight[None, :, :], axis=-1) + bias
        return jax.nn.sigmoid(logits)

    # --- per-sample path (matches torch.flatten on a (1, C, 1, 1) input) ---
    x = jax.random.normal(k_x, (1, in_channels, 1, 1), jnp.float32)
    out = jax.block_until_ready(routing_forward(x, weight, bias))
    ref = ref_routing(x.reshape(1, -1))[0]
    assert out.shape == (num_experts,)
    assert jnp.allclose(out, ref, atol=1e-5, rtol=1e-5)

    # --- batched path: 256 samples, 128-row tiles, parallel batch axis ---
    n = 256
    xb = jax.random.normal(k_xb, (n, in_channels, 1, 1), jnp.float32)
    refb = ref_routing(xb.reshape(n, -1))

    outb = jax.block_until_ready(
        routing_forward_batched(xb, weight, bias, tile_rows=128))
    assert outb.shape == (n, num_experts)
    # Tolerance loose enough to cover MXU f32 pass-decomposition differences.
    assert jnp.allclose(outb, refb, atol=1e-2, rtol=1e-2)

    # --- batched, bf16-fed MXU (v6e/v7x recommendation), f32 accumulation ---
    outb16 = jax.block_until_ready(
        routing_forward_batched(xb, weight, bias, tile_rows=128,
                                matmul_dtype=jnp.bfloat16))
    assert outb16.shape == (n, num_experts)
    assert jnp.allclose(outb16, refb, atol=5e-2, rtol=5e-2)

    print("KERNEL_OK")
</pallas_src>

<mosaic_0001>
module attributes {stable_mosaic.version = 11 : i64} {
  func.func @_routing_vpu_kernel(%arg0: memref<1x32xf32, #tpu.memory_space<vmem>>, %arg1: memref<8x32xf32, #tpu.memory_space<vmem>>, %arg2: memref<8x1xf32, #tpu.memory_space<vmem>>, %arg3: memref<8x1xf32, #tpu.memory_space<vmem>>) attributes {dimension_semantics = [], scalar_prefetch = 0 : i64, scratch_operands = 0 : i64, tpu.core_type = #tpu.core_type<tc>} {
    %c0 = arith.constant 0 : index
    %c0_0 = arith.constant 0 : index
    %0 = vector.load %arg0[%c0, %c0_0] : memref<1x32xf32, #tpu.memory_space<vmem>>, vector<1x32xf32>
    %c0_1 = arith.constant 0 : index
    %c0_2 = arith.constant 0 : index
    %1 = vector.load %arg1[%c0_1, %c0_2] : memref<8x32xf32, #tpu.memory_space<vmem>>, vector<8x32xf32>
    %2 = vector.broadcast %0 : vector<1x32xf32> to vector<8x32xf32>
    %3 = arith.mulf %2, %1 : vector<8x32xf32>
    %cst = arith.constant dense<0.000000e+00> : vector<8xf32>
    %4 = vector.multi_reduction <add>, %3, %cst [1] : vector<8x32xf32> to vector<8xf32>
    %5 = vector.shape_cast %4 : vector<8xf32> to vector<8x1xf32>
    %c0_3 = arith.constant 0 : index
    %c0_4 = arith.constant 0 : index
    %6 = vector.load %arg2[%c0_3, %c0_4] : memref<8x1xf32, #tpu.memory_space<vmem>>, vector<8x1xf32>
    %7 = arith.addf %5, %6 : vector<8x1xf32>
    %8 = arith.negf %7 : vector<8x1xf32>
    %9 = math.exp %8 : vector<8x1xf32>
    %cst_5 = arith.constant 1.000000e+00 : f32
    %10 = vector.broadcast %cst_5 : f32 to vector<8x1xf32>
    %11 = arith.addf %10, %9 : vector<8x1xf32>
    %12 = arith.divf %10, %11 : vector<8x1xf32>
    %c0_6 = arith.constant 0 : index
    %c0_7 = arith.constant 0 : index
    %13 = vector.load %arg3[%c0_6, %c0_7] : memref<8x1xf32, #tpu.memory_space<vmem>>, vector<8x1xf32>
    tpu.vector_store %arg3[%c0_6, %c0_7], %12 {strides = array<i32>} : memref<8x1xf32, #tpu.memory_space<vmem>>, vector<8x1xf32>,
    return
  }
}

</mosaic_0001>

<llo_original>
// kernel: tpu_custom_call.1
$region0: #{tpu_custom_call.1}
  #allocation0 [shape = 'u32[]', space=smem, size = 0x4, offset = 0x4, fixed_abs, tag = 'smem constant byte address 0x4 - core index']
  #allocation1 [shape = 'u32[72,128]{1,0:T(1,128)}', space=vmem, size = 0x9000, scoped, tag = 'internal scratch']
  %s0 = inlined_call_operand.vmem [shape: f32[1,32], index: 0, kind: input, shape index: {}]
  %s1 = inlined_call_operand.vmem [shape: f32[8,32], index: 1, kind: input, shape index: {}]
  %s2 = inlined_call_operand.vmem [shape: f32[8,1], index: 2, kind: input, shape index: {}]
  %s3 = inlined_call_operand.vmem [shape: f32[8,1], index: 3, kind: output, shape index: {}]
  %s4 = sld [smem:[#allocation0]]
  $region22: #{tpu_custom_call.1} parent=0
    _
  %s6 = ssub.s32 1, %s4
  %s7 = scalar_select 0, %s6, %s4
  // Predicated region
  $region2: #{tpu_custom_call.1} parent=0 // pred_check
    _
  $region3: #{tpu_custom_call.1} parent=0 // pred_check_branch
    %9 = sbr.rel (0) target = $region5
  $region4: #{tpu_custom_call.1} parent=0 // pred_region
    _
  $region5: #{tpu_custom_call.1} parent=0 // pred_fallthru
    _
  // Predicated region
  $region6: #{tpu_custom_call.1} parent=0 // pred_check
    _
  $region7: #{tpu_custom_call.1} parent=0 // pred_check_branch
    %11 = sbr.rel (0) target = $region9
  $region8: #{tpu_custom_call.1} parent=0 // pred_region
    _
  $region9: #{tpu_custom_call.1} parent=0 // pred_fallthru
    _
  // Predicated region
  $region10: #{tpu_custom_call.1} parent=0 // pred_check
    _
  $region11: #{tpu_custom_call.1} parent=0 // pred_check_branch
    %13 = sbr.rel (0) target = $region13
  $region12: #{tpu_custom_call.1} parent=0 // pred_region
    _
  $region13: #{tpu_custom_call.1} parent=0 // pred_fallthru
    _
  %v14 = vld [vmem:[%s0] sm:$0x1]
  %v15 = vld [vmem:[%s1] sm:$0xff]
  %v17 = vperm.slane %v14, 0
  %v19 = vmul.f32 %v17, %v15
  %vm20 = vcmask 261120
  %v21 = vsel %vm20, %v19, 0.0
  %22 = vadd.xlane.f32.xlu0 %v21
  %v23 = vpop.xlane.xlu0 %22
  %v24 = vld [vmem:[%s2] sm:$0xff]
  %v25 = vadd.f32 %v23, %v24
  %v26 = vxor.u32 %v25, 2147483648
  %v27 = vmul.f32 %v26, 1.442695
  %v28 = vpow.pop %v27
  %v29 = vadd.f32 %v28, 1.0
  %v30 = vrcp.pop %v29
  %v31 = vmul.f32 %v29, %v30
  %v32 = vsub.f32 1.0, %v31
  %v33 = vmul.f32 %v30, %v32
  %v34 = vadd.f32 %v30, %v33
  %vm35 = vweird.f32 %v29
  %vm36 = vweird.f32 %v30
  %vm37 = vmor %vm35, %vm36
  %v38 = vsel %vm37, %v30, %v34
  %v39 = vand.u32 2147483647, %v29
  %vm40 = vcmp.eq.f32.partialorder %v39, 8.507059e+37
  %v41 = vand.u32 %v29, 2147483648
  %v42 = vor.u32 1.1754944e-38, %v41
  %v43 = vsel %vm40, %v42, %v38
  %v44 = vmul.f32 1.0, %v43
  %vm45 = vcmask 7168
  %46 = vst.msk [vmem:[%s3] sm:$0xff] %vm45, %v44
  // Predicated region
  $region14: #{tpu_custom_call.1} parent=0 // pred_check
    _
  $region15: #{tpu_custom_call.1} parent=0 // pred_check_branch
    %48 = sbr.rel (0) target = $region17
  $region16: #{tpu_custom_call.1} parent=0 // pred_region
    _
  $region17: #{tpu_custom_call.1} parent=0 // pred_fallthru
    _
  // Predicated region
  $region18: #{tpu_custom_call.1} parent=0 // pred_check
    _
  $region19: #{tpu_custom_call.1} parent=0 // pred_check_branch
    %50 = sbr.rel (0) target = $region21
  $region20: #{tpu_custom_call.1} parent=0 // pred_region
    _
  $region21: #{tpu_custom_call.1} parent=0 // pred_fallthru
    _

</llo_original>
